<compile_context>
chip_gen: v6e
topology: v6e:2x2x1
jax: 0.10.0
libtpu: 0.0.40
codegen_flags: <defaults>
</compile_context>

<pallas_src>
import jax
import jax.numpy as jnp
from jax.experimental import pallas as pl
from jax.experimental.pallas import tpu as pltpu

EPS = 1e-5  # nn.BatchNorm2d default eps


def conv_stats_kernel(p_ref, w_ref, stats_ref):
    """Conv tile (im2col matmul) + per-tile partial channel sum / sum-of-squares."""
    y = jnp.dot(p_ref[...], w_ref[...], preferred_element_type=jnp.float32)  # (TM, Cp)
    s = jnp.sum(y, axis=0, keepdims=True)        # (1, Cp)
    sq = jnp.sum(y * y, axis=0, keepdims=True)   # (1, Cp)
    row = jax.lax.broadcasted_iota(jnp.int32, stats_ref.shape, 0)  # (8, Cp)
    stats_ref[...] = jnp.where(row == 0, s, jnp.where(row == 1, sq, 0.0))


def conv_bn_relu_kernel(p_ref, w_ref, scale_ref, shift_ref, out_ref):
    """Conv tile + folded BN (y*scale + shift) + ReLU; store only the true Cout lanes."""
    y = jnp.dot(p_ref[...], w_ref[...], preferred_element_type=jnp.float32)  # (TM, Cp)
    y = jnp.maximum(y * scale_ref[...] + shift_ref[...], 0.0)
    cout = out_ref.shape[1]
    out_ref[...] = y[:, :cout].astype(out_ref.dtype)


def cnn_layer(x_nchw, w_oihw, gamma, beta, *, tile_m=512):
    """x_nchw: (N, Cin, H, W) f32; w_oihw: (Cout, Cin, 3, 3) f32; gamma/beta: (Cout,)."""
    N, Cin, H, W = x_nchw.shape
    Cout = w_oihw.shape[0]
    K = 9 * Cin                          # 63; left unpadded (full-dim block) -> half the patch bytes
    C_pad = 128 * pl.cdiv(Cout, 128)     # 8 -> 128: dense lanes for the matmul / BN math
    M = N * H * W
    num_tiles = pl.cdiv(M, tile_m)
    M_pad = num_tiles * tile_m

    # --- Glue: NCHW -> NHWC, zero-pad spatially, im2col patches (dy, dx, cin order) ---
    x_nhwc = jnp.transpose(x_nchw, (0, 2, 3, 1))
    xp = jnp.pad(x_nhwc, ((0, 0), (1, 1), (1, 1), (0, 0)))
    patches = jnp.stack(
        [xp[:, dy:dy + H, dx:dx + W, :] for dy in range(3) for dx in range(3)],
        axis=3,                                  # (N, H, W, 9, Cin)
    ).reshape(M, K)
    patches = jnp.pad(patches, ((0, M_pad - M), (0, 0)))  # zero rows: stats-safe

    # Weight (Cout, Cin, 3, 3) -> (KH, KW, Cin, Cout) -> (K, Cout), channel-padded to C_pad.
    w_mat = jnp.transpose(w_oihw, (2, 3, 1, 0)).reshape(K, Cout)
    w_mat = jnp.pad(w_mat, ((0, 0), (0, C_pad - Cout)))

    cparams = pltpu.CompilerParams(
        dimension_semantics=("parallel",),
        vmem_limit_bytes=32 * 1024 * 1024,
    )

    # --- Pass 1: conv + per-tile partial statistics ---
    stats = pl.pallas_call(
        conv_stats_kernel,
        out_shape=jax.ShapeDtypeStruct((num_tiles * 8, C_pad), jnp.float32),
        grid=(num_tiles,),
        in_specs=[
            pl.BlockSpec((tile_m, K), lambda i: (i, 0)),
            pl.BlockSpec((K, C_pad), lambda i: (0, 0)),
        ],
        out_specs=pl.BlockSpec((8, C_pad), lambda i: (i, 0)),
        compiler_params=cparams,
        cost_estimate=pl.CostEstimate(
            flops=2 * M_pad * K * C_pad,
            transcendentals=0,
            bytes_accessed=4 * (M_pad * K + K * C_pad + num_tiles * 8 * C_pad),
        ),
    )(patches, w_mat)

    # --- Finalize stats (tiny), fold BN into per-channel scale/shift ---
    stats = stats.reshape(num_tiles, 8, C_pad)
    col_sum = jnp.sum(stats[:, 0, :], axis=0)                    # (C_pad,)
    col_sq = jnp.sum(stats[:, 1, :], axis=0)                     # (C_pad,)
    mean = col_sum / M                                           # true M (padding rows are 0)
    var = jnp.maximum(col_sq / M - mean * mean, 0.0)             # biased var, clamp cancellation
    inv = jax.lax.rsqrt(var + EPS)
    gamma_p = jnp.pad(gamma, (0, C_pad - Cout))
    beta_p = jnp.pad(beta, (0, C_pad - Cout))
    scale = (gamma_p * inv).reshape(1, C_pad)
    shift = (beta_p - mean * gamma_p * inv).reshape(1, C_pad)

    # --- Pass 2: conv (recomputed) + folded BN + ReLU, narrow (Cout-wide) writeback ---
    out = pl.pallas_call(
        conv_bn_relu_kernel,
        out_shape=jax.ShapeDtypeStruct((M_pad, Cout), jnp.float32),
        grid=(num_tiles,),
        in_specs=[
            pl.BlockSpec((tile_m, K), lambda i: (i, 0)),
            pl.BlockSpec((K, C_pad), lambda i: (0, 0)),
            pl.BlockSpec((1, C_pad), lambda i: (0, 0)),
            pl.BlockSpec((1, C_pad), lambda i: (0, 0)),
        ],
        out_specs=pl.BlockSpec((tile_m, Cout), lambda i: (i, 0)),
        compiler_params=cparams,
        cost_estimate=pl.CostEstimate(
            flops=2 * M_pad * K * C_pad + 3 * M_pad * C_pad,
            transcendentals=0,
            bytes_accessed=4 * (M_pad * K + K * C_pad + 2 * C_pad + M_pad * Cout),
        ),
    )(patches, w_mat, scale, shift)

    # --- Glue: strip M padding, back to PyTorch NCHW layout ---
    out = out[:M].reshape(N, H, W, Cout)
    return jnp.transpose(out, (0, 3, 1, 2))


def reference(x_nchw, w_oihw, gamma, beta):
    """Pure-JAX reference matching PyTorch semantics (training-mode BN)."""
    y = jax.lax.conv_general_dilated(
        x_nchw, w_oihw, window_strides=(1, 1), padding=((1, 1), (1, 1)),
        dimension_numbers=("NCHW", "OIHW", "NCHW"))
    mean = y.mean(axis=(0, 2, 3), keepdims=True)
    var = ((y - mean) ** 2).mean(axis=(0, 2, 3), keepdims=True)
    y = (y - mean) * jax.lax.rsqrt(var + EPS)
    y = y * gamma.reshape(1, -1, 1, 1) + beta.reshape(1, -1, 1, 1)
    return jnp.maximum(y, 0.0)


if __name__ == "__main__":
    in_channel, out_channel = 7, 8
    N, H, W = 4, 16, 16          # M = 1024 -> 2 tiles of 512: exercises the tiled 2-pass BN

    key = jax.random.PRNGKey(0)
    kx, kw = jax.random.split(key)

    x = jax.random.normal(kx, (N, in_channel, H, W), dtype=jnp.float32)

    # Deterministic Conv2d-style init (kaiming-uniform-ish bound), no bias.
    fan_in = in_channel * 3 * 3
    bound = 1.0 / (fan_in ** 0.5)
    w = jax.random.uniform(kw, (out_channel, in_channel, 3, 3),
                           dtype=jnp.float32, minval=-bound, maxval=bound)

    # BatchNorm2d default affine init: weight=1, bias=0.
    gamma = jnp.ones((out_channel,), dtype=jnp.float32)
    beta = jnp.zeros((out_channel,), dtype=jnp.float32)

    y = jax.block_until_ready(cnn_layer(x, w, gamma, beta))
    y_ref = jax.block_until_ready(reference(x, w, gamma, beta))

    assert y.shape == (N, out_channel, H, W)
    assert jnp.allclose(y, y_ref, atol=2e-3, rtol=2e-3), "mismatch vs reference"
    print("KERNEL_OK")
</pallas_src>

<mosaic_0001>
module attributes {stable_mosaic.version = 11 : i64} {
  func.func @conv_stats_kernel(%arg0: i32, %arg1: memref<512x63xf32, #tpu.memory_space<vmem>>, %arg2: memref<63x128xf32, #tpu.memory_space<vmem>>, %arg3: memref<8x128xf32, #tpu.memory_space<vmem>>) attributes {dimension_semantics = [#tpu.dimension_semantics<parallel>], iteration_bounds = array<i64: 2>, scalar_prefetch = 0 : i64, scratch_operands = 0 : i64, tpu.core_type = #tpu.core_type<tc>, window_params = [{transform_indices = @transform_0, window_bounds = array<i64: 512, 63>}, {pipeline_mode = #tpu.pipeline_mode<synchronous>, transform_indices = @transform_1, window_bounds = array<i64: 63, 128>}, {transform_indices = @transform_2, window_bounds = array<i64: 8, 128>}]} {
    %c0 = arith.constant 0 : index
    %c0_0 = arith.constant 0 : index
    %0 = vector.load %arg1[%c0, %c0_0] : memref<512x63xf32, #tpu.memory_space<vmem>>, vector<512x63xf32>
    %c0_1 = arith.constant 0 : index
    %c0_2 = arith.constant 0 : index
    %1 = vector.load %arg2[%c0_1, %c0_2] : memref<63x128xf32, #tpu.memory_space<vmem>>, vector<63x128xf32>
    %cst = arith.constant dense<0.000000e+00> : vector<512x128xf32>
    %2 = tpu.matmul %0, %1, %cst {dimension_numbers = #tpu.dot_dimension_numbers<[1], [0], [0], [1], [0, 0, 1, 1], [], []>} : vector<512x63xf32>, vector<63x128xf32>, vector<512x128xf32> -> vector<512x128xf32>
    %cst_3 = arith.constant dense<0.000000e+00> : vector<128xf32>
    %3 = vector.multi_reduction <add>, %2, %cst_3 [0] : vector<512x128xf32> to vector<128xf32>
    %4 = vector.shape_cast %3 : vector<128xf32> to vector<1x128xf32>
    %5 = arith.mulf %2, %2 : vector<512x128xf32>
    %cst_4 = arith.constant dense<0.000000e+00> : vector<128xf32>
    %6 = vector.multi_reduction <add>, %5, %cst_4 [0] : vector<512x128xf32> to vector<128xf32>
    %7 = vector.shape_cast %6 : vector<128xf32> to vector<1x128xf32>
    %8 = tpu.iota {dimensions = array<i32: 0>} : vector<8x128xi32>
    %c0_i32 = arith.constant 0 : i32
    %9 = vector.broadcast %c0_i32 : i32 to vector<8x128xi32>
    %10 = arith.cmpi eq, %8, %9 : vector<8x128xi32>
    %c1_i32 = arith.constant 1 : i32
    %11 = vector.broadcast %c1_i32 : i32 to vector<8x128xi32>
    %12 = arith.cmpi eq, %8, %11 : vector<8x128xi32>
    %cst_5 = arith.constant 0.000000e+00 : f32
    %13 = vector.shape_cast %7 : vector<1x128xf32> to vector<1x128xf32>
    %14 = vector.broadcast %13 : vector<1x128xf32> to vector<8x128xf32>
    %15 = vector.broadcast %cst_5 : f32 to vector<8x128xf32>
    %16 = arith.select %12, %14, %15 : vector<8x128xi1>, vector<8x128xf32>
    %17 = vector.shape_cast %4 : vector<1x128xf32> to vector<1x128xf32>
    %18 = vector.broadcast %17 : vector<1x128xf32> to vector<8x128xf32>
    %19 = arith.select %10, %18, %16 : vector<8x128xi1>, vector<8x128xf32>
    %c0_6 = arith.constant 0 : index
    %c0_7 = arith.constant 0 : index
    %20 = vector.load %arg3[%c0_6, %c0_7] : memref<8x128xf32, #tpu.memory_space<vmem>>, vector<8x128xf32>
    tpu.vector_store %arg3[%c0_6, %c0_7], %19 {strides = array<i32>} : memref<8x128xf32, #tpu.memory_space<vmem>>, vector<8x128xf32>,
    return
  }
  func.func @transform_0(%arg0: i32) -> (i32, i32) {
    %c0_i32 = arith.constant 0 : i32
    %c0_i32_0 = arith.constant 0 : i32
    return %arg0, %c0_i32 : i32, i32
  }
  func.func @transform_1(%arg0: i32) -> (i32, i32) {
    %c0_i32 = arith.constant 0 : i32
    %c0_i32_0 = arith.constant 0 : i32
    %c0_i32_1 = arith.constant 0 : i32
    return %c0_i32, %c0_i32_0 : i32, i32
  }
  func.func @transform_2(%arg0: i32) -> (i32, i32) {
    %c0_i32 = arith.constant 0 : i32
    %c0_i32_0 = arith.constant 0 : i32
    return %arg0, %c0_i32 : i32, i32
  }
}

</mosaic_0001>

<llo_original>
// kernel: tpu_custom_call.1
$region0: #{tpu_custom_call.1}
  #allocation0 [shape = 'u32[]', space=smem, size = 0x4, offset = 0x4, fixed_abs, tag = 'smem constant byte address 0x4 - core index']
  #allocation1 [shape = 'u32[144,128]{1,0:T(1,128)}', space=vmem, size = 0x12000, scoped, tag = 'internal scratch']
  %s0 = inlined_call_operand.vmem [shape: f32[1024,63], index: 0, kind: input, shape index: {}]
  %s1 = inlined_call_operand.vmem [shape: f32[63,128], index: 1, kind: input, shape index: {}]
  %s2 = inlined_call_operand.hbm [shape: f32[16,128], index: 2, kind: output, shape index: {}]
  %s3 = sld [smem:[#allocation0]]
  $region41: #{tpu_custom_call.1} parent=0
    _
  %s5 = ssub.s32 1, %s3
  %s6 = scalar_select 0, %s5, %s3
  $region1: #{tpu_custom_call.1} parent=0
    #allocation2 [shape = 'u8[8192]{0}', space=vmem, size = 0x2000, scoped, tag = 'output window, operand 0']
    #allocation3 [shape = 's32[2]{0}', space=sflag, size = 0x8, scoped, tag = 'scoped memory for tpu_custom_call.1']
    %7 = vsyncpa [#allocation3], 0
    %s8 = scalar_lea.sflag [#allocation3], 1
    %9 = vsyncpa %s8, 0
    loop: start=0, step=1, limit=4
    $region2: #{tpu_custom_call.1} parent=1 // loop_pre_header
      _
    $region3: #{tpu_custom_call.1} parent=1 // loop_header
      %s11 = sphi 0, %s15
      %p12 = scmp.ge.s32.totalorder %s11, 4
      %s21 = sphi 0, %s23
      %s24 = sphi 0, %s21
      %s25 = sphi 0, %s24
      %s41 = sphi 0, %s25
      %s45 = sphi 0, %s45
      %s47 = sphi 0, %s45
      %s48 = sphi 0, %s47
      %s62 = sphi 0, %s48
      %s68 = sphi 0, %s70
      %s71 = sphi 0, %s68
      %s72 = sphi 0, %s71
      %s88 = sphi 0, %s72
    $region4: #{tpu_custom_call.1} parent=1 // loop_header_branch
      %14 = sbr.rel (%p12) target = $region8
    $region5: #{tpu_custom_call.1} parent=1 // loop_body
      %s16 = ssub.s32 %s11, 1
      %s17 = ssub.s32 %s11, 2
      %s18 = sadd.s32 %s11, 1
      %s19 = ssub.s32 %s11, %s18
      %p20 = scmp.eq.s32.totalorder %s19, 0
      %s22 = sadd.s32 %s21, 1
      %s23 = scalar_select %p20, %s21, %s22
      %p26 = pneg %p20
      %p27 = scmp.eq.s32.totalorder %s11, 1
      %p28 = por %p26, %p27
      %p29 = scmp.ne.s32.totalorder %s21, %s24
      %p30 = scmp.eq.s32.totalorder %s11, 0
      %p31 = por %p29, %p30
      %p32 = scmp.ne.s32.totalorder %s21, %s24
      %p33 = scmp.eq.s32.totalorder %s16, 1
      %p34 = por %p32, %p33
      %p35 = scmp.ne.s32.totalorder %s24, %s25
      %p36 = scmp.eq.s32.totalorder %s16, 0
      %p37 = por %p35, %p36
      %p38 = scmp.ne.s32.totalorder %s24, %s25
      %p39 = scmp.eq.s32.totalorder %s17, 1
      %p40 = por %p38, %p39
      %p42 = scmp.ne.s32.totalorder %s25, %s41
      %p43 = scmp.eq.s32.totalorder %s17, 0
      %p44 = por %p42, %p43
      %s46 = sadd.s32 %s45, 1
      %p49 = scmp.eq.s32.totalorder %s11, 1
      %p50 = scmp.ne.s32.totalorder %s45, %s47
      %p51 = scmp.eq.s32.totalorder %s11, 0
      %p52 = por %p50, %p51
      %p53 = scmp.ne.s32.totalorder %s45, %s47
      %p54 = scmp.eq.s32.totalorder %s16, 1
      %p55 = por %p53, %p54
      %p56 = scmp.ne.s32.totalorder %s47, %s48
      %p57 = scmp.eq.s32.totalorder %s16, 0
      %p58 = por %p56, %p57
      %p59 = scmp.ne.s32.totalorder %s47, %s48
      %p60 = scmp.eq.s32.totalorder %s17, 1
      %p61 = por %p59, %p60
      %p63 = scmp.ne.s32.totalorder %s48, %s62
      %p64 = scmp.eq.s32.totalorder %s17, 0
      %p65 = por %p63, %p64
      %s66 = ssub.s32 %s11, %s18
      %p67 = scmp.eq.s32.totalorder %s66, 0
      %s69 = sadd.s32 %s68, 1
      %s70 = scalar_select %p67, %s68, %s69
      %p73 = pneg %p67
      %p74 = scmp.eq.s32.totalorder %s11, 1
      %p75 = por %p73, %p74
      %p76 = scmp.ne.s32.totalorder %s68, %s71
      %p77 = scmp.eq.s32.totalorder %s11, 0
      %p78 = por %p76, %p77
      %p79 = scmp.ne.s32.totalorder %s68, %s71
      %p80 = scmp.eq.s32.totalorder %s16, 1
      %p81 = por %p79, %p80
      %p82 = scmp.ne.s32.totalorder %s71, %s72
      %p83 = scmp.eq.s32.totalorder %s16, 0
      %p84 = por %p82, %p83
      %p85 = scmp.ne.s32.totalorder %s71, %s72
      %p86 = scmp.eq.s32.totalorder %s17, 1
      %p87 = por %p85, %p86
      %p89 = scmp.ne.s32.totalorder %s72, %s88
      %p90 = scmp.eq.s32.totalorder %s17, 0
      %p91 = por %p89, %p90
      %p92 = scmp.le.s32.totalorder 1, %s11
      %p93 = scmp.lt.s32.totalorder %s11, 3
      %p94 = pnand %p92, %p93
      %p95 = pneg %p94
      // Predicated region
      $region9: #{tpu_custom_call.1} parent=5 // pred_check
        _
      $region10: #{tpu_custom_call.1} parent=5 // pred_check_branch
        %97 = sbr.rel (%p94) target = $region12
      $region11: #{tpu_custom_call.1} parent=5 // pred_region
        %s98 = ssub.s32 %s11, 1
        // Predicated region
        $region13: #{tpu_custom_call.1} parent=11 // pred_check
          %p99 = pneg %p58
        $region14: #{tpu_custom_call.1} parent=11 // pred_check_branch
          %101 = sbr.rel (%p99) target = $region16
        $region15: #{tpu_custom_call.1} parent=11 // pred_region
          _
        $region16: #{tpu_custom_call.1} parent=11 // pred_fallthru
          _
      $region12: #{tpu_custom_call.1} parent=5 // pred_fallthru
        _
      %p102 = scmp.lt.s32.totalorder %s11, 2
      // Predicated region
      $region17: #{tpu_custom_call.1} parent=5 // pred_check
        %p103 = pneg %p102
      $region18: #{tpu_custom_call.1} parent=5 // pred_check_branch
        %105 = sbr.rel (%p103) target = $region20
      $region19: #{tpu_custom_call.1} parent=5 // pred_region
        // Predicated region
        $region21: #{tpu_custom_call.1} parent=19 // pred_check
          %p106 = pneg %p31
        $region22: #{tpu_custom_call.1} parent=19 // pred_check_branch
          %108 = sbr.rel (%p106) target = $region24
        $region23: #{tpu_custom_call.1} parent=19 // pred_region
          %s109 = smul.u32 64, %s11
          %p110 = scmp.lt.s32.totalorder %s109, 127
          %s111 = scalar_select %p110, %s109, 127
          %s112 = smul.addr %s111, 8
          %s113 = scalar_lea.vmem %s0, %s112
          %s114 = smul.u32 64, %s11
        $region24: #{tpu_custom_call.1} parent=19 // pred_fallthru
          _
      $region20: #{tpu_custom_call.1} parent=5 // pred_fallthru
        _
      %p115 = scmp.le.s32.totalorder 1, %s11
      %p116 = scmp.lt.s32.totalorder %s11, 3
      %p117 = pnand %p115, %p116
      %p118 = pneg %p117
      // Predicated region
      $region25: #{tpu_custom_call.1} parent=5 // pred_check
        _
      $region26: #{tpu_custom_call.1} parent=5 // pred_check_branch
        %120 = sbr.rel (%p117) target = $region28
      $region27: #{tpu_custom_call.1} parent=5 // pred_region
        %s121 = ssub.s32 %s11, 1
        %s122 = smul.u32 64, %s16
        %p123 = scmp.lt.s32.totalorder %s122, 127
        %s124 = scalar_select %p123, %s122, 127
        %s125 = smul.addr %s124, 8
        %s126 = scalar_lea.vmem %s0, %s125
        %p127 = pneg %p37
        %p128 = pneg %p34
        %p129 = pneg %p58
        %p130 = pneg %p55
        %p131 = pneg %p84
        %p132 = pneg %p81
        %s133 = sand.u32 %s71, 1
        %s134 = scalar_lea.sflag [#allocation3], %s133
        %s135 = sand.u32 %s71, 1
        %s136 = smul.addr %s135, 8
        %s137 = scalar_lea.vmem [#allocation2], %s136
        %s138 = smul.u32 64, %s16
        %p139 = scmp.lt.s32.totalorder %s138, 127
        %s140 = scalar_select %p139, %s138, 127
        %s141 = smul.addr %s140, 8
        %s142 = scalar_lea.vmem %s0, %s141
        %s143 = smul.u32 64, %s16
        %v144 = vld [vmem:[%s142] sm:$0xff]
        %v145 = vld [vmem:[%s142 + $0x8] sm:$0xff]
        %v146 = vld [vmem:[%s142 + $0x10] sm:$0xff]
        %v147 = vld [vmem:[%s142 + $0x18] sm:$0xff]
        %v148 = vld [vmem:[%s142 + $0x20] sm:$0xff]
        %v149 = vld [vmem:[%s142 + $0x28] sm:$0xff]
        %v150 = vld [vmem:[%s142 + $0x30] sm:$0xff]
        %v151 = vld [vmem:[%s142 + $0x38] sm:$0xff]
        %v152 = vld [vmem:[%s142 + $0x40] sm:$0xff]
        %v153 = vld [vmem:[%s142 + $0x48] sm:$0xff]
        %v154 = vld [vmem:[%s142 + $0x50] sm:$0xff]
        %v155 = vld [vmem:[%s142 + $0x58] sm:$0xff]
        %v156 = vld [vmem:[%s142 + $0x60] sm:$0xff]
        %v157 = vld [vmem:[%s142 + $0x68] sm:$0xff]
        %v158 = vld [vmem:[%s142 + $0x70] sm:$0xff]
        %v159 = vld [vmem:[%s142 + $0x78] sm:$0xff]
        %v160 = vld [vmem:[%s142 + $0x80] sm:$0xff]
        %v161 = vld [vmem:[%s142 + $0x88] sm:$0xff]
        %v162 = vld [vmem:[%s142 + $0x90] sm:$0xff]
        %v163 = vld [vmem:[%s142 + $0x98] sm:$0xff]
        %v164 = vld [vmem:[%s142 + $0xa0] sm:$0xff]
        %v165 = vld [vmem:[%s142 + $0xa8] sm:$0xff]
        %v166 = vld [vmem:[%s142 + $0xb0] sm:$0xff]
        %v167 = vld [vmem:[%s142 + $0xb8] sm:$0xff]
        %v168 = vld [vmem:[%s142 + $0xc0] sm:$0xff]
        %v169 = vld [vmem:[%s142 + $0xc8] sm:$0xff]
        %v170 = vld [vmem:[%s142 + $0xd0] sm:$0xff]
        %v171 = vld [vmem:[%s142 + $0xd8] sm:$0xff]
        %v172 = vld [vmem:[%s142 + $0xe0] sm:$0xff]
        %v173 = vld [vmem:[%s142 + $0xe8] sm:$0xff]
        %v174 = vld [vmem:[%s142 + $0xf0] sm:$0xff]
        %v175 = vld [vmem:[%s142 + $0xf8] sm:$0xff]
        %v176 = vld [vmem:[%s142 + $0x100] sm:$0xff]
        %v177 = vld [vmem:[%s142 + $0x108] sm:$0xff]
        %v178 = vld [vmem:[%s142 + $0x110] sm:$0xff]
        %v179 = vld [vmem:[%s142 + $0x118] sm:$0xff]
        %v180 = vld [vmem:[%s142 + $0x120] sm:$0xff]
        %v181 = vld [vmem:[%s142 + $0x128] sm:$0xff]
        %v182 = vld [vmem:[%s142 + $0x130] sm:$0xff]
        %v183 = vld [vmem:[%s142 + $0x138] sm:$0xff]
        %v184 = vld [vmem:[%s142 + $0x140] sm:$0xff]
        %v185 = vld [vmem:[%s142 + $0x148] sm:$0xff]
        %v186 = vld [vmem:[%s142 + $0x150] sm:$0xff]
        %v187 = vld [vmem:[%s142 + $0x158] sm:$0xff]
        %v188 = vld [vmem:[%s142 + $0x160] sm:$0xff]
        %v189 = vld [vmem:[%s142 + $0x168] sm:$0xff]
        %v190 = vld [vmem:[%s142 + $0x170] sm:$0xff]
        %v191 = vld [vmem:[%s142 + $0x178] sm:$0xff]
        %v192 = vld [vmem:[%s142 + $0x180] sm:$0xff]
        %v193 = vld [vmem:[%s142 + $0x188] sm:$0xff]
        %v194 = vld [vmem:[%s142 + $0x190] sm:$0xff]
        %v195 = vld [vmem:[%s142 + $0x198] sm:$0xff]
        %v196 = vld [vmem:[%s142 + $0x1a0] sm:$0xff]
        %v197 = vld [vmem:[%s142 + $0x1a8] sm:$0xff]
        %v198 = vld [vmem:[%s142 + $0x1b0] sm:$0xff]
        %v199 = vld [vmem:[%s142 + $0x1b8] sm:$0xff]
        %v200 = vld [vmem:[%s142 + $0x1c0] sm:$0xff]
        %v201 = vld [vmem:[%s142 + $0x1c8] sm:$0xff]
        %v202 = vld [vmem:[%s142 + $0x1d0] sm:$0xff]
        %v203 = vld [vmem:[%s142 + $0x1d8] sm:$0xff]
        %v204 = vld [vmem:[%s142 + $0x1e0] sm:$0xff]
        %v205 = vld [vmem:[%s142 + $0x1e8] sm:$0xff]
        %v206 = vld [vmem:[%s142 + $0x1f0] sm:$0xff]
        %v207 = vld [vmem:[%s142 + $0x1f8] sm:$0xff]
        %v208 = vld [vmem:[%s1] sm:$0xff]
        %v209 = vld [vmem:[%s1 + $0x8] sm:$0xff]
        %v210 = vld [vmem:[%s1 + $0x10] sm:$0xff]
        %v211 = vld [vmem:[%s1 + $0x18] sm:$0xff]
        %v212 = vld [vmem:[%s1 + $0x20] sm:$0xff]
        %v213 = vld [vmem:[%s1 + $0x28] sm:$0xff]
        %v214 = vld [vmem:[%s1 + $0x30] sm:$0xff]
        %v215 = vld [vmem:[%s1 + $0x38] sm:$0x7f]
        %vm216 = vcmask 515072
        %v218 = vsel %vm216, %v144, 0
        %v221 = vsel %vm216, %v145, 0
        %v224 = vsel %vm216, %v146, 0
        %v227 = vsel %vm216, %v147, 0
        %v230 = vsel %vm216, %v148, 0
        %v233 = vsel %vm216, %v149, 0
        %v236 = vsel %vm216, %v150, 0
        %v239 = vsel %vm216, %v151, 0
        %v242 = vsel %vm216, %v152, 0
        %v245 = vsel %vm216, %v153, 0
        %v248 = vsel %vm216, %v154, 0
        %v251 = vsel %vm216, %v155, 0
        %v254 = vsel %vm216, %v156, 0
        %v257 = vsel %vm216, %v157, 0
        %v260 = vsel %vm216, %v158, 0
        %v263 = vsel %vm216, %v159, 0
        %v266 = vsel %vm216, %v160, 0
        %v269 = vsel %vm216, %v161, 0
        %v272 = vsel %vm216, %v162, 0
        %v275 = vsel %vm216, %v163, 0
        %v278 = vsel %vm216, %v164, 0
        %v281 = vsel %vm216, %v165, 0
        %v284 = vsel %vm216, %v166, 0
        %v287 = vsel %vm216, %v167, 0
        %v290 = vsel %vm216, %v168, 0
        %v293 = vsel %vm216, %v169, 0
        %v296 = vsel %vm216, %v170, 0
        %v299 = vsel %vm216, %v171, 0
        %v302 = vsel %vm216, %v172, 0
        %v305 = vsel %vm216, %v173, 0
        %v308 = vsel %vm216, %v174, 0
        %v311 = vsel %vm216, %v175, 0
        %v314 = vsel %vm216, %v176, 0
        %v317 = vsel %vm216, %v177, 0
        %v320 = vsel %vm216, %v178, 0
        %v323 = vsel %vm216, %v179, 0
        %v326 = vsel %vm216, %v180, 0
        %v329 = vsel %vm216, %v181, 0
        %v332 = vsel %vm216, %v182, 0
        %v335 = vsel %vm216, %v183, 0
        %v338 = vsel %vm216, %v184, 0
        %v341 = vsel %vm216, %v185, 0
        %v344 = vsel %vm216, %v186, 0
        %v347 = vsel %vm216, %v187, 0
        %v350 = vsel %vm216, %v188, 0
        %v353 = vsel %vm216, %v189, 0
        %v356 = vsel %vm216, %v190, 0
        %v359 = vsel %vm216, %v191, 0
        %v362 = vsel %vm216, %v192, 0
        %v365 = vsel %vm216, %v193, 0
        %v368 = vsel %vm216, %v194, 0
        %v371 = vsel %vm216, %v195, 0
        %v374 = vsel %vm216, %v196, 0
        %v377 = vsel %vm216, %v197, 0
        %v380 = vsel %vm216, %v198, 0
        %v383 = vsel %vm216, %v199, 0
        %v386 = vsel %vm216, %v200, 0
        %v389 = vsel %vm216, %v201, 0
        %v392 = vsel %vm216, %v202, 0
        %v395 = vsel %vm216, %v203, 0
        %v398 = vsel %vm216, %v204, 0
        %v401 = vsel %vm216, %v205, 0
        %v404 = vsel %vm216, %v206, 0
        %v407 = vsel %vm216, %v207, 0
        %vm409 = vcmask 1046528
        %v411 = vsel %vm409, %v215, 0
        %413 = vmatprep.subr.mxu0 0.0
        %414 = vmatpush1.msra.mxu0 0.0
        %415 = vmatprep.subr.mxu0 0.0
        %416 = vmatpush1.msra.mxu0 0.0
        %417 = vmatprep.subr.mxu0 0.0
        %418 = vmatpush1.msra.mxu0 0.0
        %419 = vmatprep.subr.mxu0 0.0
        %420 = vmatpush1.msra.mxu0 0.0
        %421 = vmatprep.subr.mxu0 0.0
        %422 = vmatpush1.msra.mxu0 0.0
        %423 = vmatprep.subr.mxu0 0.0
        %424 = vmatpush1.msra.mxu0 0.0
        %425 = vmatprep.subr.mxu0 0.0
        %426 = vmatpush1.msra.mxu0 0.0
        %427 = vmatprep.subr.mxu0 0.0
        %428 = vmatpush1.msra.mxu0 0.0
        %429 = vmatprep.subr.mxu0 0.0
        %430 = vmatpush1.msra.mxu0 %v411
        %431 = vmatprep.subr.mxu0 0.0
        %432 = vmatpush1.msra.mxu0 %v214
        %433 = vmatprep.subr.mxu0 0.0
        %434 = vmatpush1.msra.mxu0 %v213
        %435 = vmatprep.subr.mxu0 0.0
        %436 = vmatpush1.msra.mxu0 %v212
        %437 = vmatprep.subr.mxu0 0.0
        %438 = vmatpush1.msra.mxu0 %v211
        %439 = vmatprep.subr.mxu0 0.0
        %440 = vmatpush1.msra.mxu0 %v210
        %441 = vmatprep.subr.mxu0 0.0
        %442 = vmatpush1.msra.mxu0 %v209
        %443 = vmatprep.subr.mxu0 0.0
        %444 = vmatpush1.msra.mxu0 %v208
        %445 = vmatprep.subr.mxu0 0.0
        %446 = vmatpush2.msra.mxu0 0.0
        %447 = vmatprep.subr.mxu0 0.0
        %448 = vmatpush2.msra.mxu0 0.0
        %449 = vmatprep.subr.mxu0 0.0
        %450 = vmatpush2.msra.mxu0 0.0
        %451 = vmatprep.subr.mxu0 0.0
        %452 = vmatpush2.msra.mxu0 0.0
        %453 = vmatprep.subr.mxu0 0.0
        %454 = vmatpush2.msra.mxu0 0.0
        %455 = vmatprep.subr.mxu0 0.0
        %456 = vmatpush2.msra.mxu0 0.0
        %457 = vmatprep.subr.mxu0 0.0
        %458 = vmatpush2.msra.mxu0 0.0
        %459 = vmatprep.subr.mxu0 0.0
        %460 = vmatpush2.msra.mxu0 0.0
        %461 = vmatprep.subr.mxu0 0.0
        %462 = vmatpush2.msra.mxu0 0.0
        %463 = vmatprep.subr.mxu0 0.0
        %464 = vmatpush2.msra.mxu0 0.0
        %465 = vmatprep.subr.mxu0 0.0
        %466 = vmatpush2.msra.mxu0 0.0
        %467 = vmatprep.subr.mxu0 0.0
        %468 = vmatpush2.msra.mxu0 0.0
        %469 = vmatprep.subr.mxu0 0.0
        %470 = vmatpush2.msra.mxu0 0.0
        %471 = vmatprep.subr.mxu0 0.0
        %472 = vmatpush2.msra.mxu0 0.0
        %473 = vmatprep.subr.mxu0 0.0
        %474 = vmatpush2.msra.mxu0 0.0
        %475 = vmatprep.subr.mxu0 0.0
        %476 = vmatpush2.msra.mxu0 0.0
        %477 = vmatprep.mubr.f32.mxu0 0.0
        %478 = vmatmul.mubr.f32.gmra.mxu0 %v218
        %v479 = vpop.f32.mrf.mxu0
        %v480 = vadd.f32 0.0, %v479
        %v481 = vpop.f32.mrf.mxu0
        %482 = vmatprep.mubr.f32.mxu0 0.0
        %483 = vmatmul.mubr.f32.gmra.mxu0 %v221
        %v484 = vpop.f32.mrf.mxu0
        %v485 = vadd.f32 0.0, %v484
        %v486 = vpop.f32.mrf.mxu0
        %487 = vmatprep.mubr.f32.mxu0 0.0
        %488 = vmatmul.mubr.f32.gmra.mxu0 %v224
        %v489 = vpop.f32.mrf.mxu0
        %v490 = vadd.f32 0.0, %v489
        %v491 = vpop.f32.mrf.mxu0
        %492 = vmatprep.mubr.f32.mxu0 0.0
        %493 = vmatmul.mubr.f32.gmra.mxu0 %v227
        %v494 = vpop.f32.mrf.mxu0
        %v495 = vadd.f32 0.0, %v494
        %v496 = vpop.f32.mrf.mxu0
        %497 = vmatprep.mubr.f32.mxu0 0.0
        %498 = vmatmul.mubr.f32.gmra.mxu0 %v230
        %v499 = vpop.f32.mrf.mxu0
        %v500 = vadd.f32 0.0, %v499
        %v501 = vpop.f32.mrf.mxu0
        %502 = vmatprep.mubr.f32.mxu0 0.0
        %503 = vmatmul.mubr.f32.gmra.mxu0 %v233
        %v504 = vpop.f32.mrf.mxu0
        %v505 = vadd.f32 0.0, %v504
        %v506 = vpop.f32.mrf.mxu0
        %507 = vmatprep.mubr.f32.mxu0 0.0
        %508 = vmatmul.mubr.f32.gmra.mxu0 %v236
        %v509 = vpop.f32.mrf.mxu0
        %v510 = vadd.f32 0.0, %v509
        %v511 = vpop.f32.mrf.mxu0
        %512 = vmatprep.mubr.f32.mxu0 0.0
        %513 = vmatmul.mubr.f32.gmra.mxu0 %v239
        %v514 = vpop.f32.mrf.mxu0
        %v515 = vadd.f32 0.0, %v514
        %v516 = vpop.f32.mrf.mxu0
        %517 = vmatprep.mubr.f32.mxu0 0.0
        %518 = vmatmul.mubr.f32.gmra.mxu0 %v242
        %v519 = vpop.f32.mrf.mxu0
        %v520 = vadd.f32 0.0, %v519
        %v521 = vpop.f32.mrf.mxu0
        %522 = vmatprep.mubr.f32.mxu0 0.0
        %523 = vmatmul.mubr.f32.gmra.mxu0 %v245
        %v524 = vpop.f32.mrf.mxu0
        %v525 = vadd.f32 0.0, %v524
        %v526 = vpop.f32.mrf.mxu0
        %527 = vmatprep.mubr.f32.mxu0 0.0
        %528 = vmatmul.mubr.f32.gmra.mxu0 %v248
        %v529 = vpop.f32.mrf.mxu0
        %v530 = vadd.f32 0.0, %v529
        %v531 = vpop.f32.mrf.mxu0
        %532 = vmatprep.mubr.f32.mxu0 0.0
        %533 = vmatmul.mubr.f32.gmra.mxu0 %v251
        %v534 = vpop.f32.mrf.mxu0
        %v535 = vadd.f32 0.0, %v534
        %v536 = vpop.f32.mrf.mxu0
        %537 = vmatprep.mubr.f32.mxu0 0.0
        %538 = vmatmul.mubr.f32.gmra.mxu0 %v254
        %v539 = vpop.f32.mrf.mxu0
        %v540 = vadd.f32 0.0, %v539
        %v541 = vpop.f32.mrf.mxu0
        %542 = vmatprep.mubr.f32.mxu0 0.0
        %543 = vmatmul.mubr.f32.gmra.mxu0 %v257
        %v544 = vpop.f32.mrf.mxu0
        %v545 = vadd.f32 0.0, %v544
        %v546 = vpop.f32.mrf.mxu0
        %547 = vmatprep.mubr.f32.mxu0 0.0
        %548 = vmatmul.mubr.f32.gmra.mxu0 %v260
        %v549 = vpop.f32.mrf.mxu0
        %v550 = vadd.f32 0.0, %v549
        %v551 = vpop.f32.mrf.mxu0
        %552 = vmatprep.mubr.f32.mxu0 0.0
        %553 = vmatmul.mubr.f32.gmra.mxu0 %v263
        %v554 = vpop.f32.mrf.mxu0
        %v555 = vadd.f32 0.0, %v554
        %v556 = vpop.f32.mrf.mxu0
        %557 = vmatprep.mubr.f32.mxu0 0.0
        %558 = vmatmul.mubr.f32.gmra.mxu0 %v266
        %v559 = vpop.f32.mrf.mxu0
        %v560 = vadd.f32 0.0, %v559
        %v561 = vpop.f32.mrf.mxu0
        %562 = vmatprep.mubr.f32.mxu0 0.0
        %563 = vmatmul.mubr.f32.gmra.mxu0 %v269
        %v564 = vpop.f32.mrf.mxu0
        %v565 = vadd.f32 0.0, %v564
        %v566 = vpop.f32.mrf.mxu0
        %567 = vmatprep.mubr.f32.mxu0 0.0
        %568 = vmatmul.mubr.f32.gmra.mxu0 %v272
        %v569 = vpop.f32.mrf.mxu0
        %v570 = vadd.f32 0.0, %v569
        %v571 = vpop.f32.mrf.mxu0
        %572 = vmatprep.mubr.f32.mxu0 0.0
        %573 = vmatmul.mubr.f32.gmra.mxu0 %v275
        %v574 = vpop.f32.mrf.mxu0
        %v575 = vadd.f32 0.0, %v574
        %v576 = vpop.f32.mrf.mxu0
        %577 = vmatprep.mubr.f32.mxu0 0.0
        %578 = vmatmul.mubr.f32.gmra.mxu0 %v278
        %v579 = vpop.f32.mrf.mxu0
        %v580 = vadd.f32 0.0, %v579
        %v581 = vpop.f32.mrf.mxu0
        %582 = vmatprep.mubr.f32.mxu0 0.0
        %583 = vmatmul.mubr.f32.gmra.mxu0 %v281
        %v584 = vpop.f32.mrf.mxu0
        %v585 = vadd.f32 0.0, %v584
        %v586 = vpop.f32.mrf.mxu0
        %587 = vmatprep.mubr.f32.mxu0 0.0
        %588 = vmatmul.mubr.f32.gmra.mxu0 %v284
        %v589 = vpop.f32.mrf.mxu0
        %v590 = vadd.f32 0.0, %v589
        %v591 = vpop.f32.mrf.mxu0
        %592 = vmatprep.mubr.f32.mxu0 0.0
        %593 = vmatmul.mubr.f32.gmra.mxu0 %v287
        %v594 = vpop.f32.mrf.mxu0
        %v595 = vadd.f32 0.0, %v594
        %v596 = vpop.f32.mrf.mxu0
        %597 = vmatprep.mubr.f32.mxu0 0.0
        %598 = vmatmul.mubr.f32.gmra.mxu0 %v290
        %v599 = vpop.f32.mrf.mxu0
        %v600 = vadd.f32 0.0, %v599
        %v601 = vpop.f32.mrf.mxu0
        %602 = vmatprep.mubr.f32.mxu0 0.0
        %603 = vmatmul.mubr.f32.gmra.mxu0 %v293
        %v604 = vpop.f32.mrf.mxu0
        %v605 = vadd.f32 0.0, %v604
        %v606 = vpop.f32.mrf.mxu0
        %607 = vmatprep.mubr.f32.mxu0 0.0
        %608 = vmatmul.mubr.f32.gmra.mxu0 %v296
        %v609 = vpop.f32.mrf.mxu0
        %v610 = vadd.f32 0.0, %v609
        %v611 = vpop.f32.mrf.mxu0
        %612 = vmatprep.mubr.f32.mxu0 0.0
        %613 = vmatmul.mubr.f32.gmra.mxu0 %v299
        %v614 = vpop.f32.mrf.mxu0
        %v615 = vadd.f32 0.0, %v614
        %v616 = vpop.f32.mrf.mxu0
        %617 = vmatprep.mubr.f32.mxu0 0.0
        %618 = vmatmul.mubr.f32.gmra.mxu0 %v302
        %v619 = vpop.f32.mrf.mxu0
        %v620 = vadd.f32 0.0, %v619
        %v621 = vpop.f32.mrf.mxu0
        %622 = vmatprep.mubr.f32.mxu0 0.0
        %623 = vmatmul.mubr.f32.gmra.mxu0 %v305
        %v624 = vpop.f32.mrf.mxu0
        %v625 = vadd.f32 0.0, %v624
        %v626 = vpop.f32.mrf.mxu0
        %627 = vmatprep.mubr.f32.mxu0 0.0
        %628 = vmatmul.mubr.f32.gmra.mxu0 %v308
        %v629 = vpop.f32.mrf.mxu0
        %v630 = vadd.f32 0.0, %v629
        %v631 = vpop.f32.mrf.mxu0
        %632 = vmatprep.mubr.f32.mxu0 0.0
        %633 = vmatmul.mubr.f32.gmra.mxu0 %v311
        %v634 = vpop.f32.mrf.mxu0
        %v635 = vadd.f32 0.0, %v634
        %v636 = vpop.f32.mrf.mxu0
        %637 = vmatprep.mubr.f32.mxu0 0.0
        %638 = vmatmul.mubr.f32.gmra.mxu0 %v314
        %v639 = vpop.f32.mrf.mxu0
        %v640 = vadd.f32 0.0, %v639
        %v641 = vpop.f32.mrf.mxu0
        %642 = vmatprep.mubr.f32.mxu0 0.0
        %643 = vmatmul.mubr.f32.gmra.mxu0 %v317
        %v644 = vpop.f32.mrf.mxu0
        %v645 = vadd.f32 0.0, %v644
        %v646 = vpop.f32.mrf.mxu0
        %647 = vmatprep.mubr.f32.mxu0 0.0
        %648 = vmatmul.mubr.f32.gmra.mxu0 %v320
        %v649 = vpop.f32.mrf.mxu0
        %v650 = vadd.f32 0.0, %v649
        %v651 = vpop.f32.mrf.mxu0
        %652 = vmatprep.mubr.f32.mxu0 0.0
        %653 = vmatmul.mubr.f32.gmra.mxu0 %v323
        %v654 = vpop.f32.mrf.mxu0
        %v655 = vadd.f32 0.0, %v654
        %v656 = vpop.f32.mrf.mxu0
        %657 = vmatprep.mubr.f32.mxu0 0.0
        %658 = vmatmul.mubr.f32.gmra.mxu0 %v326
        %v659 = vpop.f32.mrf.mxu0
        %v660 = vadd.f32 0.0, %v659
        %v661 = vpop.f32.mrf.mxu0
        %662 = vmatprep.mubr.f32.mxu0 0.0
        %663 = vmatmul.mubr.f32.gmra.mxu0 %v329
        %v664 = vpop.f32.mrf.mxu0
        %v665 = vadd.f32 0.0, %v664
        %v666 = vpop.f32.mrf.mxu0
        %667 = vmatprep.mubr.f32.mxu0 0.0
        %668 = vmatmul.mubr.f32.gmra.mxu0 %v332
        %v669 = vpop.f32.mrf.mxu0
        %v670 = vadd.f32 0.0, %v669
        %v671 = vpop.f32.mrf.mxu0
        %672 = vmatprep.mubr.f32.mxu0 0.0
        %673 = vmatmul.mubr.f32.gmra.mxu0 %v335
        %v674 = vpop.f32.mrf.mxu0
        %v675 = vadd.f32 0.0, %v674
        %v676 = vpop.f32.mrf.mxu0
        %677 = vmatprep.mubr.f32.mxu0 0.0
        %678 = vmatmul.mubr.f32.gmra.mxu0 %v338
        %v679 = vpop.f32.mrf.mxu0
        %v680 = vadd.f32 0.0, %v679
        %v681 = vpop.f32.mrf.mxu0
        %682 = vmatprep.mubr.f32.mxu0 0.0
        %683 = vmatmul.mubr.f32.gmra.mxu0 %v341
        %v684 = vpop.f32.mrf.mxu0
        %v685 = vadd.f32 0.0, %v684
        %v686 = vpop.f32.mrf.mxu0
        %687 = vmatprep.mubr.f32.mxu0 0.0
        %688 = vmatmul.mubr.f32.gmra.mxu0 %v344
        %v689 = vpop.f32.mrf.mxu0
        %v690 = vadd.f32 0.0, %v689
        %v691 = vpop.f32.mrf.mxu0
        %692 = vmatprep.mubr.f32.mxu0 0.0
        %693 = vmatmul.mubr.f32.gmra.mxu0 %v347
        %v694 = vpop.f32.mrf.mxu0
        %v695 = vadd.f32 0.0, %v694
        %v696 = vpop.f32.mrf.mxu0
        %697 = vmatprep.mubr.f32.mxu0 0.0
        %698 = vmatmul.mubr.f32.gmra.mxu0 %v350
        %v699 = vpop.f32.mrf.mxu0
        %v700 = vadd.f32 0.0, %v699
        %v701 = vpop.f32.mrf.mxu0
        %702 = vmatprep.mubr.f32.mxu0 0.0
        %703 = vmatmul.mubr.f32.gmra.mxu0 %v353
        %v704 = vpop.f32.mrf.mxu0
        %v705 = vadd.f32 0.0, %v704
        %v706 = vpop.f32.mrf.mxu0
        %707 = vmatprep.mubr.f32.mxu0 0.0
        %708 = vmatmul.mubr.f32.gmra.mxu0 %v356
        %v709 = vpop.f32.mrf.mxu0
        %v710 = vadd.f32 0.0, %v709
        %v711 = vpop.f32.mrf.mxu0
        %712 = vmatprep.mubr.f32.mxu0 0.0
        %713 = vmatmul.mubr.f32.gmra.mxu0 %v359
        %v714 = vpop.f32.mrf.mxu0
        %v715 = vadd.f32 0.0, %v714
        %v716 = vpop.f32.mrf.mxu0
        %717 = vmatprep.mubr.f32.mxu0 0.0
        %718 = vmatmul.mubr.f32.gmra.mxu0 %v362
        %v719 = vpop.f32.mrf.mxu0
        %v720 = vadd.f32 0.0, %v719
        %v721 = vpop.f32.mrf.mxu0
        %722 = vmatprep.mubr.f32.mxu0 0.0
        %723 = vmatmul.mubr.f32.gmra.mxu0 %v365
        %v724 = vpop.f32.mrf.mxu0
        %v725 = vadd.f32 0.0, %v724
        %v726 = vpop.f32.mrf.mxu0
        %727 = vmatprep.mubr.f32.mxu0 0.0
        %728 = vmatmul.mubr.f32.gmra.mxu0 %v368
        %v729 = vpop.f32.mrf.mxu0
        %v730 = vadd.f32 0.0, %v729
        %v731 = vpop.f32.mrf.mxu0
        %732 = vmatprep.mubr.f32.mxu0 0.0
        %733 = vmatmul.mubr.f32.gmra.mxu0 %v371
        %v734 = vpop.f32.mrf.mxu0
        %v735 = vadd.f32 0.0, %v734
        %v736 = vpop.f32.mrf.mxu0
        %737 = vmatprep.mubr.f32.mxu0 0.0
        %738 = vmatmul.mubr.f32.gmra.mxu0 %v374
        %v739 = vpop.f32.mrf.mxu0
        %v740 = vadd.f32 0.0, %v739
        %v741 = vpop.f32.mrf.mxu0
        %742 = vmatprep.mubr.f32.mxu0 0.0
        %743 = vmatmul.mubr.f32.gmra.mxu0 %v377
        %v744 = vpop.f32.mrf.mxu0
        %v745 = vadd.f32 0.0, %v744
        %v746 = vpop.f32.mrf.mxu0
        %747 = vmatprep.mubr.f32.mxu0 0.0
        %748 = vmatmul.mubr.f32.gmra.mxu0 %v380
        %v749 = vpop.f32.mrf.mxu0
        %v750 = vadd.f32 0.0, %v749
        %v751 = vpop.f32.mrf.mxu0
        %752 = vmatprep.mubr.f32.mxu0 0.0
        %753 = vmatmul.mubr.f32.gmra.mxu0 %v383
        %v754 = vpop.f32.mrf.mxu0
        %v755 = vadd.f32 0.0, %v754
        %v756 = vpop.f32.mrf.mxu0
        %757 = vmatprep.mubr.f32.mxu0 0.0
        %758 = vmatmul.mubr.f32.gmra.mxu0 %v386
        %v759 = vpop.f32.mrf.mxu0
        %v760 = vadd.f32 0.0, %v759
        %v761 = vpop.f32.mrf.mxu0
        %762 = vmatprep.mubr.f32.mxu0 0.0
        %763 = vmatmul.mubr.f32.gmra.mxu0 %v389
        %v764 = vpop.f32.mrf.mxu0
        %v765 = vadd.f32 0.0, %v764
        %v766 = vpop.f32.mrf.mxu0
        %767 = vmatprep.mubr.f32.mxu0 0.0
        %768 = vmatmul.mubr.f32.gmra.mxu0 %v392
        %v769 = vpop.f32.mrf.mxu0
        %v770 = vadd.f32 0.0, %v769
        %v771 = vpop.f32.mrf.mxu0
        %772 = vmatprep.mubr.f32.mxu0 0.0
        %773 = vmatmul.mubr.f32.gmra.mxu0 %v395
        %v774 = vpop.f32.mrf.mxu0
        %v775 = vadd.f32 0.0, %v774
        %v776 = vpop.f32.mrf.mxu0
        %777 = vmatprep.mubr.f32.mxu0 0.0
        %778 = vmatmul.mubr.f32.gmra.mxu0 %v398
        %v779 = vpop.f32.mrf.mxu0
        %v780 = vadd.f32 0.0, %v779
        %v781 = vpop.f32.mrf.mxu0
        %782 = vmatprep.mubr.f32.mxu0 0.0
        %783 = vmatmul.mubr.f32.gmra.mxu0 %v401
        %v784 = vpop.f32.mrf.mxu0
        %v785 = vadd.f32 0.0, %v784
        %v786 = vpop.f32.mrf.mxu0
        %787 = vmatprep.mubr.f32.mxu0 0.0
        %788 = vmatmul.mubr.f32.gmra.mxu0 %v404
        %v789 = vpop.f32.mrf.mxu0
        %v790 = vadd.f32 0.0, %v789
        %v791 = vpop.f32.mrf.mxu0
        %792 = vmatprep.mubr.f32.mxu0 0.0
        %793 = vmatmul.mubr.f32.gmra.mxu0 %v407
        %v794 = vpop.f32.mrf.mxu0
        %v795 = vadd.f32 0.0, %v794
        %v796 = vpop.f32.mrf.mxu0
        %797 = vdwg.mxu0
        %v798 = vadd.f32 %v480, %v485
        %v799 = vadd.f32 %v798, %v490
        %v800 = vadd.f32 %v799, %v495
        %v801 = vadd.f32 %v800, %v500
        %v802 = vadd.f32 %v801, %v505
        %v803 = vadd.f32 %v802, %v510
        %v804 = vadd.f32 %v803, %v515
        %v805 = vadd.f32 %v804, %v520
        %v806 = vadd.f32 %v805, %v525
        %v807 = vadd.f32 %v806, %v530
        %v808 = vadd.f32 %v807, %v535
        %v809 = vadd.f32 %v808, %v540
        %v810 = vadd.f32 %v809, %v545
        %v811 = vadd.f32 %v810, %v550
        %v812 = vadd.f32 %v811, %v555
        %v813 = vadd.f32 %v812, %v560
        %v814 = vadd.f32 %v813, %v565
        %v815 = vadd.f32 %v814, %v570
        %v816 = vadd.f32 %v815, %v575
        %v817 = vadd.f32 %v816, %v580
        %v818 = vadd.f32 %v817, %v585
        %v819 = vadd.f32 %v818, %v590
        %v820 = vadd.f32 %v819, %v595
        %v821 = vadd.f32 %v820, %v600
        %v822 = vadd.f32 %v821, %v605
        %v823 = vadd.f32 %v822, %v610
        %v824 = vadd.f32 %v823, %v615
        %v825 = vadd.f32 %v824, %v620
        %v826 = vadd.f32 %v825, %v625
        %v827 = vadd.f32 %v826, %v630
        %v828 = vadd.f32 %v827, %v635
        %v829 = vadd.f32 %v828, %v640
        %v830 = vadd.f32 %v829, %v645
        %v831 = vadd.f32 %v830, %v650
        %v832 = vadd.f32 %v831, %v655
        %v833 = vadd.f32 %v832, %v660
        %v834 = vadd.f32 %v833, %v665
        %v835 = vadd.f32 %v834, %v670
        %v836 = vadd.f32 %v835, %v675
        %v837 = vadd.f32 %v836, %v680
        %v838 = vadd.f32 %v837, %v685
        %v839 = vadd.f32 %v838, %v690
        %v840 = vadd.f32 %v839, %v695
        %v841 = vadd.f32 %v840, %v700
        %v842 = vadd.f32 %v841, %v705
        %v843 = vadd.f32 %v842, %v710
        %v844 = vadd.f32 %v843, %v715
        %v845 = vadd.f32 %v844, %v720
        %v846 = vadd.f32 %v845, %v725
        %v847 = vadd.f32 %v846, %v730
        %v848 = vadd.f32 %v847, %v735
        %v849 = vadd.f32 %v848, %v740
        %v850 = vadd.f32 %v849, %v745
        %v851 = vadd.f32 %v850, %v750
        %v852 = vadd.f32 %v851, %v755
        %v853 = vadd.f32 %v852, %v760
        %v854 = vadd.f32 %v853, %v765
        %v855 = vadd.f32 %v854, %v770
        %v856 = vadd.f32 %v855, %v775
        %v857 = vadd.f32 %v856, %v780
        %v858 = vadd.f32 %v857, %v785
        %v859 = vadd.f32 %v858, %v790
        %v860 = vadd.f32 %v859, %v795
        %v861 = vrot.slane %v860, 4
        %v862 = vadd.f32 %v860, %v861
        %v863 = vrot.slane %v862, 2
        %v864 = vadd.f32 %v862, %v863
        %v865 = vrot.slane %v864, 1
        %v866 = vadd.f32 %v864, %v865
        %v867 = vmul.f32 %v480, %v480
        %v868 = vmul.f32 %v485, %v485
        %v869 = vmul.f32 %v490, %v490
        %v870 = vmul.f32 %v495, %v495
        %v871 = vmul.f32 %v500, %v500
        %v872 = vmul.f32 %v505, %v505
        %v873 = vmul.f32 %v510, %v510
        %v874 = vmul.f32 %v515, %v515
        %v875 = vmul.f32 %v520, %v520
        %v876 = vmul.f32 %v525, %v525
        %v877 = vmul.f32 %v530, %v530
        %v878 = vmul.f32 %v535, %v535
        %v879 = vmul.f32 %v540, %v540
        %v880 = vmul.f32 %v545, %v545
        %v881 = vmul.f32 %v550, %v550
        %v882 = vmul.f32 %v555, %v555
        %v883 = vmul.f32 %v560, %v560
        %v884 = vmul.f32 %v565, %v565
        %v885 = vmul.f32 %v570, %v570
        %v886 = vmul.f32 %v575, %v575
        %v887 = vmul.f32 %v580, %v580
        %v888 = vmul.f32 %v585, %v585
        %v889 = vmul.f32 %v590, %v590
        %v890 = vmul.f32 %v595, %v595
        %v891 = vmul.f32 %v600, %v600
        %v892 = vmul.f32 %v605, %v605
        %v893 = vmul.f32 %v610, %v610
        %v894 = vmul.f32 %v615, %v615
        %v895 = vmul.f32 %v620, %v620
        %v896 = vmul.f32 %v625, %v625
        %v897 = vmul.f32 %v630, %v630
        %v898 = vmul.f32 %v635, %v635
        %v899 = vmul.f32 %v640, %v640
        %v900 = vmul.f32 %v645, %v645
        %v901 = vmul.f32 %v650, %v650
        %v902 = vmul.f32 %v655, %v655
        %v903 = vmul.f32 %v660, %v660
        %v904 = vmul.f32 %v665, %v665
        %v905 = vmul.f32 %v670, %v670
        %v906 = vmul.f32 %v675, %v675
        %v907 = vmul.f32 %v680, %v680
        %v908 = vmul.f32 %v685, %v685
        %v909 = vmul.f32 %v690, %v690
        %v910 = vmul.f32 %v695, %v695
        %v911 = vmul.f32 %v700, %v700
        %v912 = vmul.f32 %v705, %v705
        %v913 = vmul.f32 %v710, %v710
        %v914 = vmul.f32 %v715, %v715
        %v915 = vmul.f32 %v720, %v720
        %v916 = vmul.f32 %v725, %v725
        %v917 = vmul.f32 %v730, %v730
        %v918 = vmul.f32 %v735, %v735
        %v919 = vmul.f32 %v740, %v740
        %v920 = vmul.f32 %v745, %v745
        %v921 = vmul.f32 %v750, %v750
        %v922 = vmul.f32 %v755, %v755
        %v923 = vmul.f32 %v760, %v760
        %v924 = vmul.f32 %v765, %v765
        %v925 = vmul.f32 %v770, %v770
        %v926 = vmul.f32 %v775, %v775
        %v927 = vmul.f32 %v780, %v780
        %v928 = vmul.f32 %v785, %v785
        %v929 = vmul.f32 %v790, %v790
        %v930 = vmul.f32 %v795, %v795
        %v931 = vadd.f32 %v867, %v868
        %v932 = vadd.f32 %v931, %v869
        %v933 = vadd.f32 %v932, %v870
        %v934 = vadd.f32 %v933, %v871
        %v935 = vadd.f32 %v934, %v872
        %v936 = vadd.f32 %v935, %v873
        %v937 = vadd.f32 %v936, %v874
        %v938 = vadd.f32 %v937, %v875
        %v939 = vadd.f32 %v938, %v876
        %v940 = vadd.f32 %v939, %v877
        %v941 = vadd.f32 %v940, %v878
        %v942 = vadd.f32 %v941, %v879
        %v943 = vadd.f32 %v942, %v880
        %v944 = vadd.f32 %v943, %v881
        %v945 = vadd.f32 %v944, %v882
        %v946 = vadd.f32 %v945, %v883
        %v947 = vadd.f32 %v946, %v884
        %v948 = vadd.f32 %v947, %v885
        %v949 = vadd.f32 %v948, %v886
        %v950 = vadd.f32 %v949, %v887
        %v951 = vadd.f32 %v950, %v888
        %v952 = vadd.f32 %v951, %v889
        %v953 = vadd.f32 %v952, %v890
        %v954 = vadd.f32 %v953, %v891
        %v955 = vadd.f32 %v954, %v892
        %v956 = vadd.f32 %v955, %v893
        %v957 = vadd.f32 %v956, %v894
        %v958 = vadd.f32 %v957, %v895
        %v959 = vadd.f32 %v958, %v896
        %v960 = vadd.f32 %v959, %v897
        %v961 = vadd.f32 %v960, %v898
        %v962 = vadd.f32 %v961, %v899
        %v963 = vadd.f32 %v962, %v900
        %v964 = vadd.f32 %v963, %v901
        %v965 = vadd.f32 %v964, %v902
        %v966 = vadd.f32 %v965, %v903
        %v967 = vadd.f32 %v966, %v904
        %v968 = vadd.f32 %v967, %v905
        %v969 = vadd.f32 %v968, %v906
        %v970 = vadd.f32 %v969, %v907
        %v971 = vadd.f32 %v970, %v908
        %v972 = vadd.f32 %v971, %v909
        %v973 = vadd.f32 %v972, %v910
        %v974 = vadd.f32 %v973, %v911
        %v975 = vadd.f32 %v974, %v912
        %v976 = vadd.f32 %v975, %v913
        %v977 = vadd.f32 %v976, %v914
        %v978 = vadd.f32 %v977, %v915
        %v979 = vadd.f32 %v978, %v916
        %v980 = vadd.f32 %v979, %v917
        %v981 = vadd.f32 %v980, %v918
        %v982 = vadd.f32 %v981, %v919
        %v983 = vadd.f32 %v982, %v920
        %v984 = vadd.f32 %v983, %v921
        %v985 = vadd.f32 %v984, %v922
        %v986 = vadd.f32 %v985, %v923
        %v987 = vadd.f32 %v986, %v924
        %v988 = vadd.f32 %v987, %v925
        %v989 = vadd.f32 %v988, %v926
        %v990 = vadd.f32 %v989, %v927
        %v991 = vadd.f32 %v990, %v928
        %v992 = vadd.f32 %v991, %v929
        %v993 = vadd.f32 %v992, %v930
        %v994 = vrot.slane %v993, 4
        %v995 = vadd.f32 %v993, %v994
        %v996 = vrot.slane %v995, 2
        %v997 = vadd.f32 %v995, %v996
        %v998 = vrot.slane %v997, 1
        %v999 = vadd.f32 %v997, %v998
        %v1000 = vlaneseq
        %v1001 = vshrl.u32 %v1000, 7
        %vm1002 = vcmp.eq.s32.totalorder %v1001, 0
        %vm1003 = vcmp.eq.s32.totalorder %v1001, 1
        %v1004 = vsel %vm1003, %v999, 0.0
        %v1005 = vsel %vm1002, %v866, %v1004
        %1006 = vst [vmem:[%s137] sm:$0xff] %v1005
        %s1007 = sand.u32 %s71, 1
        %s1008 = scalar_lea.sflag [#allocation3], %s1007
        %s1009 = sand.u32 %s71, 1
        %s1010 = smul.addr %s1009, 8
        %s1011 = scalar_lea.vmem [#allocation2], %s1010
        // Predicated region
        $region29: #{tpu_custom_call.1} parent=27 // pred_check
          %p1012 = pneg %p81
        $region30: #{tpu_custom_call.1} parent=27 // pred_check_branch
          %1014 = sbr.rel (%p1012) target = $region32
        $region31: #{tpu_custom_call.1} parent=27 // pred_region
          %s1016 = ssub.s32 128, 128
          %1017 = vsyncadd %s1008, %s1016
          %s1018 = smul.addr %s16, 128
          %s1019 = scalar_lea.hbm %s2, %s1018
          %s1021 = sshll.u32 %s1011, 4
          %s1022 = int_to_ptr.vmem [resolvable:$true] %s1021
          %1024 = dma.vmem_to_hbm [thread:$0]  %s1022, 128, %s1019, %s1008
        $region32: #{tpu_custom_call.1} parent=27 // pred_fallthru
          _
      $region28: #{tpu_custom_call.1} parent=5 // pred_fallthru
        _
      %p1025 = scmp.le.s32.totalorder 2, %s11
      // Predicated region
      $region33: #{tpu_custom_call.1} parent=5 // pred_check
        %p1026 = pneg %p1025
      $region34: #{tpu_custom_call.1} parent=5 // pred_check_branch
        %1028 = sbr.rel (%p1026) target = $region36
      $region35: #{tpu_custom_call.1} parent=5 // pred_region
        %s1029 = ssub.s32 %s11, 2
        // Predicated region
        $region37: #{tpu_custom_call.1} parent=35 // pred_check
          %p1030 = pneg %p87
        $region38: #{tpu_custom_call.1} parent=35 // pred_check_branch
          %1032 = sbr.rel (%p1030) target = $region40
        $region39: #{tpu_custom_call.1} parent=35 // pred_region
          %s1033 = sand.u32 %s72, 1
          %s1034 = scalar_lea.sflag [#allocation3], %s1033
          %s1035 = sand.u32 %s72, 1
          %s1036 = smul.addr %s1035, 8
          %s1037 = scalar_lea.vmem [#allocation2], %s1036
          %1038 = dma.done %s1034, 128
        $region40: #{tpu_custom_call.1} parent=35 // pred_fallthru
          _
      $region36: #{tpu_custom_call.1} parent=5 // pred_fallthru
        _
    $region6: #{tpu_custom_call.1} parent=1 // loop_footer
      %s15 = sadd.s32 1, %s11
    $region7: #{tpu_custom_call.1} parent=1 // loop_footer_branch
      %10 = sbr.rel target = $region3
    $region8: #{tpu_custom_call.1} parent=1 // loop_exit
      _
    %1039 = vsyncpa [#allocation3], 1
    %s1040 = scalar_lea.sflag [#allocation3], 1
    %1041 = vsyncpa %s1040, 1

</llo_original>
